<compile_context>
chip_gen: v7x
topology: tpu7x:2x2x1
jax: 0.10.0
libtpu: 0.0.40
codegen_flags: <defaults>
</compile_context>

<pallas_src>
import jax
import jax.numpy as jnp
from jax import lax
from jax.experimental import pallas as pl
from jax.experimental.pallas import tpu as pltpu

NEG_SLOPE = 0.2  # nn.LeakyReLU(negative_slope=0.2)


def _leaky_relu(x):
    # max(x, 0.2*x) == leaky_relu(x) for slope < 1; 2 VALU ops instead of 3.
    return jnp.maximum(x, NEG_SLOPE * x)


def _round_up(n, m):
    return ((n + m - 1) // m) * m


# --------------------------------------------------------------------------------------
# Kernel bodies (trace-time specialized on presence of labels)
# --------------------------------------------------------------------------------------
def _kernel_with_labels(x_ref, w1t_ref, b1_ref, w2t_ref, b2_ref, b7_ref,
                        y_ref, embp_ref, out_ref):
    """One (BM, F) batch tile, labeled path.

    x_ref    : [BM, F]  f32/bf16  encoder features
    w1t_ref  : [F, F]   bf16      spectrally-normalized linear1 weight, pre-transposed
    b1_ref   : [1, F]   f32
    w2t_ref  : [F, F]   bf16      spectrally-normalized linear2 weight, pre-transposed
    b2_ref   : [1, F]   f32
    b7_ref   : [1]      f32       SMEM scalar
    y_ref    : [BM, 1]  int32     class labels
    embp_ref : [Cp, F]  f32       (embedding + w7) table, rows padded to a multiple of 8
    out_ref  : [BM, 1]  f32
    """
    x_raw = x_ref[...]
    h_in = x_raw.astype(jnp.float32)                              # skip path stays f32

    # h = LeakyReLU(linear1(h_in)) -- bf16 MXU operands, f32 accumulate, f32 VPU math.
    h = jnp.dot(x_raw.astype(jnp.bfloat16), w1t_ref[...],
                preferred_element_type=jnp.float32) + b1_ref[...]
    h = _leaky_relu(h)

    # h = LeakyReLU(linear2(h))
    h = jnp.dot(h.astype(jnp.bfloat16), w2t_ref[...],
                preferred_element_type=jnp.float32) + b2_ref[...]
    h = _leaky_relu(h)

    # skip connection
    h = h + h_in

    # Fused l7 + class projection with w7 folded into the table on the host:
    #   h @ w7.T + b7 + sum(emb[y] * h, -1) == sum(h * (emb + w7)[y], -1) + b7
    bm = out_ref.shape[0]
    c_pad = embp_ref.shape[0]
    y_col = y_ref[...]                                            # [BM, 1] int32
    onehot = (y_col == lax.broadcasted_iota(jnp.int32, (bm, c_pad), 1)
              ).astype(jnp.float32)                               # exact 0/1, one per row
    factor = jnp.dot(onehot, embp_ref[...],
                     preferred_element_type=jnp.float32)          # [BM, F] = (emb+w7)[y]

    out_ref[...] = jnp.sum(h * factor, axis=1, keepdims=True) + b7_ref[0]


def _kernel_no_labels(x_ref, w1t_ref, b1_ref, w2t_ref, b2_ref, w7_ref, b7_ref, out_ref):
    """One (BM, F) batch tile, unlabeled path (no embedding traffic)."""
    x_raw = x_ref[...]
    h_in = x_raw.astype(jnp.float32)

    h = jnp.dot(x_raw.astype(jnp.bfloat16), w1t_ref[...],
                preferred_element_type=jnp.float32) + b1_ref[...]
    h = _leaky_relu(h)

    h = jnp.dot(h.astype(jnp.bfloat16), w2t_ref[...],
                preferred_element_type=jnp.float32) + b2_ref[...]
    h = _leaky_relu(h)

    h = h + h_in

    # output = l7(h) = sum(h * w7_row, -1) + b7  (no N=1 MXU matmul)
    out_ref[...] = jnp.sum(h * w7_ref[...], axis=1, keepdims=True) + b7_ref[0]


# --------------------------------------------------------------------------------------
# Wrapper
# --------------------------------------------------------------------------------------
def _vmem_budget_bytes(BM, F, C_pad, labeled):
    """Footprint-derived VMEM limit: clamp to [32 MiB, 48 MiB] (v5e default is 16 MiB;
    v7x has only 64 MiB per TC)."""
    x_bytes = 2 * BM * F * 4            # x double buffer (f32 worst case)
    out_bytes = 2 * BM * 4              # output double buffer
    w_bytes = 2 * (2 * F * F * 2)       # w1t, w2t bf16, default double-buffered
    vec_bytes = 2 * (3 * F * 4)         # b1, b2, w7 rows
    emb_bytes = (2 * C_pad * F * 4 + 2 * BM * 4) if labeled else 0
    interm = 3 * BM * F * 4             # h / factor / onehot intermediates (generous)
    est = x_bytes + out_bytes + w_bytes + vec_bytes + emb_bytes + interm
    return int(min(max(2 * est, 32 << 20), 48 << 20))


def snpd_skip_no_bn_forward(x, params, y=None, *, block_b=1024):
    """x: [B, F] features (identity encoder), f32 or bf16. y: optional int32 [B] labels."""
    B, F = x.shape
    if x.dtype not in (jnp.float32, jnp.bfloat16):
        x = x.astype(jnp.float32)

    # Batch tile: multiple of 8 sublanes, default 1024 rows to amortize per-grid-step overhead
    # in this HBM-bound regime (x is the only per-step DMA stream).
    BM = min(block_b, _round_up(B, 8))
    # v7x megacore: make sure there are >= 2 grid steps so both TensorCores get work.
    # Harmless extra step on single-TC v5e/v6e.
    if B >= 16 and B <= BM:
        BM = _round_up(pl.cdiv(B, 2), 8)
    B_pad = _round_up(B, BM)
    nb = B_pad // BM

    x_p = x if B_pad == B else jnp.pad(x, ((0, B_pad - B), (0, 0)))

    # Parameter prep (layout only): pre-transpose weights, bf16 MXU operands for the two
    # square matmuls, f32 everywhere else.
    w1t = params["w1"].T.astype(jnp.bfloat16)                     # [F, F]
    w2t = params["w2"].T.astype(jnp.bfloat16)                     # [F, F]
    b1 = params["b1"].reshape(1, F).astype(jnp.float32)
    b2 = params["b2"].reshape(1, F).astype(jnp.float32)
    w7 = params["w7"].reshape(1, F).astype(jnp.float32)           # l7 weight as a row
    b7 = params["b7"].reshape(1).astype(jnp.float32)              # SMEM scalar

    resident = lambda shape: pl.BlockSpec(shape, lambda i: (0, 0))
    tiled = lambda shape: pl.BlockSpec(shape, lambda i: (i, 0))

    in_specs = [
        tiled((BM, F)),                                    # x tile (only per-step DMA)
        resident((F, F)),                                  # w1t (bf16), stays in VMEM
        resident((1, F)),                                  # b1
        resident((F, F)),                                  # w2t (bf16)
        resident((1, F)),                                  # b2
    ]
    args = [x_p, w1t, b1, w2t, b2]

    labeled = y is not None
    C_pad = 8
    if labeled:
        # Fold w7 into the embedding table (exact: one-hot rows sum to exactly 1).
        embp = params["emb_table"].astype(jnp.float32) + w7       # [C, F]
        C = embp.shape[0]
        C_pad = _round_up(C, 8)
        if C_pad != C:
            embp = jnp.pad(embp, ((0, C_pad - C), (0, 0)))
        y_col = y.astype(jnp.int32).reshape(B, 1)
        if B_pad != B:
            y_col = jnp.pad(y_col, ((0, B_pad - B), (0, 0)))      # padded rows read class 0
        in_specs += [
            pl.BlockSpec(memory_space=pltpu.MemorySpace.SMEM),    # b7 scalar
            tiled((BM, 1)),                                       # y column tile
            resident((C_pad, F)),                                 # (emb + w7) table, resident
        ]
        args += [b7, y_col, embp]
        kernel = _kernel_with_labels
    else:
        in_specs += [
            resident((1, F)),                                     # w7 row (unlabeled only)
            pl.BlockSpec(memory_space=pltpu.MemorySpace.SMEM),    # b7 scalar
        ]
        args += [w7, b7]
        kernel = _kernel_no_labels                                # trace-time specialization

    out = pl.pallas_call(
        kernel,
        out_shape=jax.ShapeDtypeStruct((B_pad, 1), jnp.float32),
        grid=(nb,),
        in_specs=in_specs,
        out_specs=tiled((BM, 1)),
        compiler_params=pltpu.CompilerParams(
            # TODO(synk): if "parallel" is observed not to shard the batch axis across v7x's
            # two TensorCores, switch to pltpu.CORE_PARALLEL / an explicit core_map.
            dimension_semantics=("parallel",),
            vmem_limit_bytes=_vmem_budget_bytes(BM, F, C_pad, labeled),
        ),
    )(*args)
    return out[:B]


# --------------------------------------------------------------------------------------
# Parameter setup (spectral normalization done once in plain JAX)
# --------------------------------------------------------------------------------------
def spectral_normalize(w):
    sigma = jnp.linalg.norm(w, ord=2)
    return w / sigma


def make_params(key, num_features, num_classes):
    k1, k2, k3, k4, k5, k6 = jax.random.split(key, 6)
    F = num_features

    bound = 1.0 / jnp.sqrt(F)
    w1 = jax.random.uniform(k1, (F, F), jnp.float32, -bound, bound)
    b1 = jax.random.uniform(k2, (F,), jnp.float32, -bound, bound)
    w2 = jax.random.uniform(k3, (F, F), jnp.float32, -bound, bound)
    b2 = jax.random.uniform(k4, (F,), jnp.float32, -bound, bound)

    xb = jnp.sqrt(6.0 / (F + 1))
    w7 = jax.random.uniform(k5, (1, F), jnp.float32, -xb, xb)
    b7 = jnp.zeros((1,), jnp.float32)

    eb = jnp.sqrt(6.0 / (num_classes + F))
    emb_table = jax.random.uniform(k6, (num_classes, F), jnp.float32, -eb, eb)

    w1 = spectral_normalize(w1)
    w2 = spectral_normalize(w2)
    w7 = spectral_normalize(w7)
    emb_table = spectral_normalize(emb_table)

    return dict(w1=w1, b1=b1, w2=w2, b2=b2, w7=w7, b7=b7, emb_table=emb_table)


# --------------------------------------------------------------------------------------
# Reference (mirrors the kernel's bf16 matmul-operand precision, f32 elsewhere)
# --------------------------------------------------------------------------------------
def reference_forward(x, params, y=None):
    bf = lambda a: a.astype(jnp.bfloat16).astype(jnp.float32)
    h_in = x.astype(jnp.float32)
    h = _leaky_relu(jnp.dot(bf(x), bf(params["w1"].T)) + params["b1"])
    h = _leaky_relu(jnp.dot(bf(h), bf(params["w2"].T)) + params["b2"])
    h = h + h_in
    out = h @ params["w7"].T + params["b7"]
    if y is not None:
        out = out + jnp.sum(params["emb_table"][y] * h, axis=1, keepdims=True)
    return out


if __name__ == "__main__":
    B = 40                 # forces the >=2-grid-step split (BM=24, nb=2) + batch padding path
    NUM_FEATURES = 128
    NUM_CLASSES = 10

    key = jax.random.PRNGKey(0)
    kx, ky, kp = jax.random.split(key, 3)
    x = jax.random.normal(kx, (B, NUM_FEATURES), jnp.float32)
    y = jax.random.randint(ky, (B,), 0, NUM_CLASSES, jnp.int32)
    params = make_params(kp, NUM_FEATURES, NUM_CLASSES)

    # labeled path
    out = jax.block_until_ready(snpd_skip_no_bn_forward(x, params, y))
    ref = reference_forward(x, params, y)
    assert out.shape == (B, 1)
    assert jnp.allclose(out, ref, atol=3e-3, rtol=3e-3), "mismatch vs reference (labeled)"

    # y=None path (trace-time specialized kernel, no embedding traffic)
    out_nolabel = jax.block_until_ready(snpd_skip_no_bn_forward(x, params, None))
    ref_nolabel = reference_forward(x, params, None)
    assert jnp.allclose(out_nolabel, ref_nolabel, atol=3e-3, rtol=3e-3), \
        "mismatch vs reference (unlabeled)"

    print("KERNEL_OK")
</pallas_src>

<mosaic_0001>
module attributes {stable_mosaic.version = 11 : i64} {
  func.func @_kernel_with_labels(%arg0: i32, %arg1: memref<24x128xf32, #tpu.memory_space<vmem>>, %arg2: memref<128x128xbf16, #tpu.memory_space<vmem>>, %arg3: memref<1x128xf32, #tpu.memory_space<vmem>>, %arg4: memref<128x128xbf16, #tpu.memory_space<vmem>>, %arg5: memref<1x128xf32, #tpu.memory_space<vmem>>, %arg6: memref<1xf32, #tpu.memory_space<smem>>, %arg7: memref<24x1xi32, #tpu.memory_space<vmem>>, %arg8: memref<16x128xf32, #tpu.memory_space<vmem>>, %arg9: memref<24x1xf32, #tpu.memory_space<vmem>>) attributes {dimension_semantics = [#tpu.dimension_semantics<parallel>], iteration_bounds = array<i64: 2>, scalar_prefetch = 0 : i64, scratch_operands = 0 : i64, tpu.core_type = #tpu.core_type<tc>, window_params = [{transform_indices = @transform_0, window_bounds = array<i64: 24, 128>}, {pipeline_mode = #tpu.pipeline_mode<synchronous>, transform_indices = @transform_1, window_bounds = array<i64: 128, 128>}, {pipeline_mode = #tpu.pipeline_mode<synchronous>, transform_indices = @transform_2, window_bounds = array<i64: 1, 128>}, {pipeline_mode = #tpu.pipeline_mode<synchronous>, transform_indices = @transform_3, window_bounds = array<i64: 128, 128>}, {pipeline_mode = #tpu.pipeline_mode<synchronous>, transform_indices = @transform_4, window_bounds = array<i64: 1, 128>}, {transform_indices = @transform_5, window_bounds = array<i64: 1>}, {transform_indices = @transform_6, window_bounds = array<i64: 24, 1>}, {pipeline_mode = #tpu.pipeline_mode<synchronous>, transform_indices = @transform_7, window_bounds = array<i64: 16, 128>}, {transform_indices = @transform_8, window_bounds = array<i64: 24, 1>}]} {
    %c0 = arith.constant 0 : index
    %c0_0 = arith.constant 0 : index
    %0 = vector.load %arg1[%c0, %c0_0] : memref<24x128xf32, #tpu.memory_space<vmem>>, vector<24x128xf32>
    %1 = arith.truncf %0 : vector<24x128xf32> to vector<24x128xbf16>
    %c0_1 = arith.constant 0 : index
    %c0_2 = arith.constant 0 : index
    %2 = vector.load %arg2[%c0_1, %c0_2] : memref<128x128xbf16, #tpu.memory_space<vmem>>, vector<128x128xbf16>
    %cst = arith.constant dense<0.000000e+00> : vector<24x128xf32>
    %3 = tpu.matmul %1, %2, %cst {dimension_numbers = #tpu.dot_dimension_numbers<[1], [0], [0], [1], [0, 0, 1, 1], [], []>} : vector<24x128xbf16>, vector<128x128xbf16>, vector<24x128xf32> -> vector<24x128xf32>
    %c0_3 = arith.constant 0 : index
    %c0_4 = arith.constant 0 : index
    %4 = vector.load %arg3[%c0_3, %c0_4] : memref<1x128xf32, #tpu.memory_space<vmem>>, vector<1x128xf32>
    %5 = vector.broadcast %4 : vector<1x128xf32> to vector<24x128xf32>
    %6 = arith.addf %3, %5 : vector<24x128xf32>
    %cst_5 = arith.constant 2.000000e-01 : f32
    %7 = vector.broadcast %cst_5 : f32 to vector<24x128xf32>
    %8 = arith.mulf %7, %6 : vector<24x128xf32>
    %9 = arith.maximumf %6, %8 : vector<24x128xf32>
    %10 = arith.truncf %9 : vector<24x128xf32> to vector<24x128xbf16>
    %c0_6 = arith.constant 0 : index
    %c0_7 = arith.constant 0 : index
    %11 = vector.load %arg4[%c0_6, %c0_7] : memref<128x128xbf16, #tpu.memory_space<vmem>>, vector<128x128xbf16>
    %cst_8 = arith.constant dense<0.000000e+00> : vector<24x128xf32>
    %12 = tpu.matmul %10, %11, %cst_8 {dimension_numbers = #tpu.dot_dimension_numbers<[1], [0], [0], [1], [0, 0, 1, 1], [], []>} : vector<24x128xbf16>, vector<128x128xbf16>, vector<24x128xf32> -> vector<24x128xf32>
    %c0_9 = arith.constant 0 : index
    %c0_10 = arith.constant 0 : index
    %13 = vector.load %arg5[%c0_9, %c0_10] : memref<1x128xf32, #tpu.memory_space<vmem>>, vector<1x128xf32>
    %14 = vector.broadcast %13 : vector<1x128xf32> to vector<24x128xf32>
    %15 = arith.addf %12, %14 : vector<24x128xf32>
    %cst_11 = arith.constant 2.000000e-01 : f32
    %16 = vector.broadcast %cst_11 : f32 to vector<24x128xf32>
    %17 = arith.mulf %16, %15 : vector<24x128xf32>
    %18 = arith.maximumf %15, %17 : vector<24x128xf32>
    %19 = arith.addf %18, %0 : vector<24x128xf32>
    %c0_12 = arith.constant 0 : index
    %c0_13 = arith.constant 0 : index
    %20 = vector.load %arg7[%c0_12, %c0_13] : memref<24x1xi32, #tpu.memory_space<vmem>>, vector<24x1xi32>
    %21 = tpu.iota {dimensions = array<i32: 1>} : vector<24x16xi32>
    %22 = vector.broadcast %20 : vector<24x1xi32> to vector<24x16xi32>
    %23 = arith.cmpi eq, %22, %21 : vector<24x16xi32>
    %24 = arith.extui %23 : vector<24x16xi1> to vector<24x16xi32>
    %25 = arith.sitofp %24 : vector<24x16xi32> to vector<24x16xf32>
    %c0_14 = arith.constant 0 : index
    %c0_15 = arith.constant 0 : index
    %26 = vector.load %arg8[%c0_14, %c0_15] : memref<16x128xf32, #tpu.memory_space<vmem>>, vector<16x128xf32>
    %cst_16 = arith.constant dense<0.000000e+00> : vector<24x128xf32>
    %27 = tpu.matmul %25, %26, %cst_16 {dimension_numbers = #tpu.dot_dimension_numbers<[1], [0], [0], [1], [0, 0, 1, 1], [], []>} : vector<24x16xf32>, vector<16x128xf32>, vector<24x128xf32> -> vector<24x128xf32>
    %28 = arith.mulf %19, %27 : vector<24x128xf32>
    %cst_17 = arith.constant dense<0.000000e+00> : vector<24xf32>
    %29 = vector.multi_reduction <add>, %28, %cst_17 [1] : vector<24x128xf32> to vector<24xf32>
    %30 = vector.shape_cast %29 : vector<24xf32> to vector<24x1xf32>
    %c0_18 = arith.constant 0 : index
    %31 = memref.load %arg6[%c0_18] : memref<1xf32, #tpu.memory_space<smem>>
    %32 = vector.broadcast %31 : f32 to vector<24x1xf32>
    %33 = arith.addf %30, %32 : vector<24x1xf32>
    %c0_19 = arith.constant 0 : index
    %c0_20 = arith.constant 0 : index
    %34 = vector.load %arg9[%c0_19, %c0_20] : memref<24x1xf32, #tpu.memory_space<vmem>>, vector<24x1xf32>
    tpu.vector_store %arg9[%c0_19, %c0_20], %33 {strides = array<i32>} : memref<24x1xf32, #tpu.memory_space<vmem>>, vector<24x1xf32>,
    return
  }
  func.func @transform_0(%arg0: i32) -> (i32, i32) {
    %c0_i32 = arith.constant 0 : i32
    %c0_i32_0 = arith.constant 0 : i32
    return %arg0, %c0_i32 : i32, i32
  }
  func.func @transform_1(%arg0: i32) -> (i32, i32) {
    %c0_i32 = arith.constant 0 : i32
    %c0_i32_0 = arith.constant 0 : i32
    %c0_i32_1 = arith.constant 0 : i32
    return %c0_i32, %c0_i32_0 : i32, i32
  }
  func.func @transform_2(%arg0: i32) -> (i32, i32) {
    %c0_i32 = arith.constant 0 : i32
    %c0_i32_0 = arith.constant 0 : i32
    %c0_i32_1 = arith.constant 0 : i32
    return %c0_i32, %c0_i32_0 : i32, i32
  }
  func.func @transform_3(%arg0: i32) -> (i32, i32) {
    %c0_i32 = arith.constant 0 : i32
    %c0_i32_0 = arith.constant 0 : i32
    %c0_i32_1 = arith.constant 0 : i32
    return %c0_i32, %c0_i32_0 : i32, i32
  }
  func.func @transform_4(%arg0: i32) -> (i32, i32) {
    %c0_i32 = arith.constant 0 : i32
    %c0_i32_0 = arith.constant 0 : i32
    %c0_i32_1 = arith.constant 0 : i32
    return %c0_i32, %c0_i32_0 : i32, i32
  }
  func.func @transform_5(%arg0: i32) -> i32 {
    %c0_i32 = arith.constant 0 : i32
    %c0_i32_0 = arith.constant 0 : i32
    return %c0_i32 : i32
  }
  func.func @transform_6(%arg0: i32) -> (i32, i32) {
    %c0_i32 = arith.constant 0 : i32
    %c0_i32_0 = arith.constant 0 : i32
    return %arg0, %c0_i32 : i32, i32
  }
  func.func @transform_7(%arg0: i32) -> (i32, i32) {
    %c0_i32 = arith.constant 0 : i32
    %c0_i32_0 = arith.constant 0 : i32
    %c0_i32_1 = arith.constant 0 : i32
    return %c0_i32, %c0_i32_0 : i32, i32
  }
  func.func @transform_8(%arg0: i32) -> (i32, i32) {
    %c0_i32 = arith.constant 0 : i32
    %c0_i32_0 = arith.constant 0 : i32
    return %arg0, %c0_i32 : i32, i32
  }
}

</mosaic_0001>

<llo_original>
// kernel: tpu_custom_call.1
$region0: #{tpu_custom_call.1}
  #allocation0 [shape = 'u32[]', space=smem, size = 0x4, offset = 0x4, fixed_abs, tag = 'smem constant byte address 0x4 - core index']
  #allocation1 [shape = 'u32[144,128]{1,0:T(1,128)}', space=vmem, size = 0x12000, scoped, tag = 'internal scratch']
  #allocation2 [shape = 'f32[1]{0:T(128)S(6)}', space=smem, size = 0x200, scoped, tag = 'scoped memory for tpu_custom_call.1']
  %s0 = inlined_call_operand.hbm [shape: f32[48,128], index: 0, kind: input, shape index: {}]
  %s1 = inlined_call_operand.hbm [shape: bf16[128,128], index: 1, kind: input, shape index: {}]
  %s2 = inlined_call_operand.hbm [shape: f32[1,128], index: 2, kind: input, shape index: {}]
  %s3 = inlined_call_operand.vmem [shape: bf16[128,128], index: 3, kind: input, shape index: {}]
  %s4 = inlined_call_operand.vmem [shape: f32[1,128], index: 4, kind: input, shape index: {}]
  %s5 = inlined_call_operand.<no memory space> [shape: f32[1], index: 5, kind: input, shape index: {}]
  %s6 = inlined_call_operand.vmem [shape: s32[48,1], index: 6, kind: input, shape index: {}]
  %s7 = inlined_call_operand.hbm [shape: f32[16,128], index: 7, kind: input, shape index: {}]
  %s8 = inlined_call_operand.vmem [shape: f32[48,1], index: 8, kind: output, shape index: {}]
  %s9 = sld [smem:[#allocation0]]
  $region81: #{tpu_custom_call.1} parent=0
    _
  %s11 = ssub.s32 1, %s9
  %s12 = scalar_select 0, %s11, %s9
  %13 = sst [smem:[#allocation2]] %s5
  $region1: #{tpu_custom_call.1} parent=0
    #allocation3 [shape = 'u8[24576]{0}', space=vmem, size = 0x6000, scoped, tag = 'input window, operand 0']
    #allocation4 [shape = 's32[2]{0}', space=sflag, size = 0x8, scoped, tag = 'scoped memory for tpu_custom_call.1']
    #allocation5 [shape = 'u8[32768]{0}', space=vmem, size = 0x8000, scoped, tag = 'input window, operand 1, single buffered']
    #allocation6 [shape = 's32[1]{0}', space=sflag, size = 0x4, scoped, tag = 'scoped memory for tpu_custom_call.1']
    #allocation7 [shape = 'u8[512]{0}', space=vmem, size = 0x400, scoped, tag = 'input window, operand 2, single buffered']
    #allocation8 [shape = 'u8[8192]{0}', space=vmem, size = 0x2000, scoped, tag = 'input window, operand 7, single buffered']
    #allocation9 [shape = 's32[1]{0}', space=sflag, size = 0x4, scoped, tag = 'scoped memory for tpu_custom_call.1']
    %14 = vsyncpa [#allocation4], 0
    %s15 = scalar_lea.sflag [#allocation4], 1
    %16 = vsyncpa %s15, 0
    %17 = vsyncpa [#allocation6], 0
    %18 = vsyncpa [#allocation9], 0
    loop: start=0, step=1, limit=4
    $region2: #{tpu_custom_call.1} parent=1 // loop_pre_header
      _
    $region3: #{tpu_custom_call.1} parent=1 // loop_header
      %s20 = sphi 0, %s24
      %p21 = scmp.ge.s32.totalorder %s20, 4
      %s30 = sphi 0, %s32
      %s33 = sphi 0, %s30
      %s34 = sphi 0, %s33
      %s50 = sphi 0, %s34
      %s54 = sphi 0, %s54
      %s56 = sphi 0, %s54
      %s57 = sphi 0, %s56
      %s71 = sphi 0, %s57
      %s75 = sphi 0, %s75
      %s77 = sphi 0, %s75
      %s78 = sphi 0, %s77
      %s92 = sphi 0, %s78
      %s96 = sphi 0, %s96
      %s98 = sphi 0, %s96
      %s99 = sphi 0, %s98
      %s113 = sphi 0, %s99
      %s117 = sphi 0, %s117
      %s119 = sphi 0, %s117
      %s120 = sphi 0, %s119
      %s134 = sphi 0, %s120
      %s138 = sphi 0, %s138
      %s140 = sphi 0, %s138
      %s141 = sphi 0, %s140
      %s155 = sphi 0, %s141
      %s161 = sphi 0, %s163
      %s164 = sphi 0, %s161
      %s165 = sphi 0, %s164
      %s181 = sphi 0, %s165
      %s185 = sphi 0, %s185
      %s187 = sphi 0, %s185
      %s188 = sphi 0, %s187
      %s202 = sphi 0, %s188
      %s208 = sphi 0, %s210
      %s211 = sphi 0, %s208
      %s212 = sphi 0, %s211
      %s228 = sphi 0, %s212
    $region4: #{tpu_custom_call.1} parent=1 // loop_header_branch
      %23 = sbr.rel (%p21) target = $region8
    $region5: #{tpu_custom_call.1} parent=1 // loop_body
      %s25 = ssub.s32 %s20, 1
      %s26 = ssub.s32 %s20, 2
      %s27 = sadd.s32 %s20, 1
      %s28 = ssub.s32 %s20, %s27
      %p29 = scmp.eq.s32.totalorder %s28, 0
      %s31 = sadd.s32 %s30, 1
      %s32 = scalar_select %p29, %s30, %s31
      %p35 = pneg %p29
      %p36 = scmp.eq.s32.totalorder %s20, 1
      %p37 = por %p35, %p36
      %p38 = scmp.ne.s32.totalorder %s30, %s33
      %p39 = scmp.eq.s32.totalorder %s20, 0
      %p40 = por %p38, %p39
      %p41 = scmp.ne.s32.totalorder %s30, %s33
      %p42 = scmp.eq.s32.totalorder %s25, 1
      %p43 = por %p41, %p42
      %p44 = scmp.ne.s32.totalorder %s33, %s34
      %p45 = scmp.eq.s32.totalorder %s25, 0
      %p46 = por %p44, %p45
      %p47 = scmp.ne.s32.totalorder %s33, %s34
      %p48 = scmp.eq.s32.totalorder %s26, 1
      %p49 = por %p47, %p48
      %p51 = scmp.ne.s32.totalorder %s34, %s50
      %p52 = scmp.eq.s32.totalorder %s26, 0
      %p53 = por %p51, %p52
      %s55 = sadd.s32 %s54, 1
      %p58 = scmp.eq.s32.totalorder %s20, 1
      %p59 = scmp.ne.s32.totalorder %s54, %s56
      %p60 = scmp.eq.s32.totalorder %s20, 0
      %p61 = por %p59, %p60
      %p62 = scmp.ne.s32.totalorder %s54, %s56
      %p63 = scmp.eq.s32.totalorder %s25, 1
      %p64 = por %p62, %p63
      %p65 = scmp.ne.s32.totalorder %s56, %s57
      %p66 = scmp.eq.s32.totalorder %s25, 0
      %p67 = por %p65, %p66
      %p68 = scmp.ne.s32.totalorder %s56, %s57
      %p69 = scmp.eq.s32.totalorder %s26, 1
      %p70 = por %p68, %p69
      %p72 = scmp.ne.s32.totalorder %s57, %s71
      %p73 = scmp.eq.s32.totalorder %s26, 0
      %p74 = por %p72, %p73
      %s76 = sadd.s32 %s75, 1
      %p79 = scmp.eq.s32.totalorder %s20, 1
      %p80 = scmp.ne.s32.totalorder %s75, %s77
      %p81 = scmp.eq.s32.totalorder %s20, 0
      %p82 = por %p80, %p81
      %p83 = scmp.ne.s32.totalorder %s75, %s77
      %p84 = scmp.eq.s32.totalorder %s25, 1
      %p85 = por %p83, %p84
      %p86 = scmp.ne.s32.totalorder %s77, %s78
      %p87 = scmp.eq.s32.totalorder %s25, 0
      %p88 = por %p86, %p87
      %p89 = scmp.ne.s32.totalorder %s77, %s78
      %p90 = scmp.eq.s32.totalorder %s26, 1
      %p91 = por %p89, %p90
      %p93 = scmp.ne.s32.totalorder %s78, %s92
      %p94 = scmp.eq.s32.totalorder %s26, 0
      %p95 = por %p93, %p94
      %s97 = sadd.s32 %s96, 1
      %p100 = scmp.eq.s32.totalorder %s20, 1
      %p101 = scmp.ne.s32.totalorder %s96, %s98
      %p102 = scmp.eq.s32.totalorder %s20, 0
      %p103 = por %p101, %p102
      %p104 = scmp.ne.s32.totalorder %s96, %s98
      %p105 = scmp.eq.s32.totalorder %s25, 1
      %p106 = por %p104, %p105
      %p107 = scmp.ne.s32.totalorder %s98, %s99
      %p108 = scmp.eq.s32.totalorder %s25, 0
      %p109 = por %p107, %p108
      %p110 = scmp.ne.s32.totalorder %s98, %s99
      %p111 = scmp.eq.s32.totalorder %s26, 1
      %p112 = por %p110, %p111
      %p114 = scmp.ne.s32.totalorder %s99, %s113
      %p115 = scmp.eq.s32.totalorder %s26, 0
      %p116 = por %p114, %p115
      %s118 = sadd.s32 %s117, 1
      %p121 = scmp.eq.s32.totalorder %s20, 1
      %p122 = scmp.ne.s32.totalorder %s117, %s119
      %p123 = scmp.eq.s32.totalorder %s20, 0
      %p124 = por %p122, %p123
      %p125 = scmp.ne.s32.totalorder %s117, %s119
      %p126 = scmp.eq.s32.totalorder %s25, 1
      %p127 = por %p125, %p126
      %p128 = scmp.ne.s32.totalorder %s119, %s120
      %p129 = scmp.eq.s32.totalorder %s25, 0
      %p130 = por %p128, %p129
      %p131 = scmp.ne.s32.totalorder %s119, %s120
      %p132 = scmp.eq.s32.totalorder %s26, 1
      %p133 = por %p131, %p132
      %p135 = scmp.ne.s32.totalorder %s120, %s134
      %p136 = scmp.eq.s32.totalorder %s26, 0
      %p137 = por %p135, %p136
      %s139 = sadd.s32 %s138, 1
      %p142 = scmp.eq.s32.totalorder %s20, 1
      %p143 = scmp.ne.s32.totalorder %s138, %s140
      %p144 = scmp.eq.s32.totalorder %s20, 0
      %p145 = por %p143, %p144
      %p146 = scmp.ne.s32.totalorder %s138, %s140
      %p147 = scmp.eq.s32.totalorder %s25, 1
      %p148 = por %p146, %p147
      %p149 = scmp.ne.s32.totalorder %s140, %s141
      %p150 = scmp.eq.s32.totalorder %s25, 0
      %p151 = por %p149, %p150
      %p152 = scmp.ne.s32.totalorder %s140, %s141
      %p153 = scmp.eq.s32.totalorder %s26, 1
      %p154 = por %p152, %p153
      %p156 = scmp.ne.s32.totalorder %s141, %s155
      %p157 = scmp.eq.s32.totalorder %s26, 0
      %p158 = por %p156, %p157
      %s159 = ssub.s32 %s20, %s27
      %p160 = scmp.eq.s32.totalorder %s159, 0
      %s162 = sadd.s32 %s161, 1
      %s163 = scalar_select %p160, %s161, %s162
      %p166 = pneg %p160
      %p167 = scmp.eq.s32.totalorder %s20, 1
      %p168 = por %p166, %p167
      %p169 = scmp.ne.s32.totalorder %s161, %s164
      %p170 = scmp.eq.s32.totalorder %s20, 0
      %p171 = por %p169, %p170
      %p172 = scmp.ne.s32.totalorder %s161, %s164
      %p173 = scmp.eq.s32.totalorder %s25, 1
      %p174 = por %p172, %p173
      %p175 = scmp.ne.s32.totalorder %s164, %s165
      %p176 = scmp.eq.s32.totalorder %s25, 0
      %p177 = por %p175, %p176
      %p178 = scmp.ne.s32.totalorder %s164, %s165
      %p179 = scmp.eq.s32.totalorder %s26, 1
      %p180 = por %p178, %p179
      %p182 = scmp.ne.s32.totalorder %s165, %s181
      %p183 = scmp.eq.s32.totalorder %s26, 0
      %p184 = por %p182, %p183
      %s186 = sadd.s32 %s185, 1
      %p189 = scmp.eq.s32.totalorder %s20, 1
      %p190 = scmp.ne.s32.totalorder %s185, %s187
      %p191 = scmp.eq.s32.totalorder %s20, 0
      %p192 = por %p190, %p191
      %p193 = scmp.ne.s32.totalorder %s185, %s187
      %p194 = scmp.eq.s32.totalorder %s25, 1
      %p195 = por %p193, %p194
      %p196 = scmp.ne.s32.totalorder %s187, %s188
      %p197 = scmp.eq.s32.totalorder %s25, 0
      %p198 = por %p196, %p197
      %p199 = scmp.ne.s32.totalorder %s187, %s188
      %p200 = scmp.eq.s32.totalorder %s26, 1
      %p201 = por %p199, %p200
      %p203 = scmp.ne.s32.totalorder %s188, %s202
      %p204 = scmp.eq.s32.totalorder %s26, 0
      %p205 = por %p203, %p204
      %s206 = ssub.s32 %s20, %s27
      %p207 = scmp.eq.s32.totalorder %s206, 0
      %s209 = sadd.s32 %s208, 1
      %s210 = scalar_select %p207, %s208, %s209
      %p213 = pneg %p207
      %p214 = scmp.eq.s32.totalorder %s20, 1
      %p215 = por %p213, %p214
      %p216 = scmp.ne.s32.totalorder %s208, %s211
      %p217 = scmp.eq.s32.totalorder %s20, 0
      %p218 = por %p216, %p217
      %p219 = scmp.ne.s32.totalorder %s208, %s211
      %p220 = scmp.eq.s32.totalorder %s25, 1
      %p221 = por %p219, %p220
      %p222 = scmp.ne.s32.totalorder %s211, %s212
      %p223 = scmp.eq.s32.totalorder %s25, 0
      %p224 = por %p222, %p223
      %p225 = scmp.ne.s32.totalorder %s211, %s212
      %p226 = scmp.eq.s32.totalorder %s26, 1
      %p227 = por %p225, %p226
      %p229 = scmp.ne.s32.totalorder %s212, %s228
      %p230 = scmp.eq.s32.totalorder %s26, 0
      %p231 = por %p229, %p230
      %p232 = scmp.le.s32.totalorder 1, %s20
      %p233 = scmp.lt.s32.totalorder %s20, 3
      %p234 = pnand %p232, %p233
      %p235 = pneg %p234
      // Predicated region
      $region9: #{tpu_custom_call.1} parent=5 // pred_check
        _
      $region10: #{tpu_custom_call.1} parent=5 // pred_check_branch
        %237 = sbr.rel (%p234) target = $region12
      $region11: #{tpu_custom_call.1} parent=5 // pred_region
        %s238 = ssub.s32 %s20, 1
        // Predicated region
        $region13: #{tpu_custom_call.1} parent=11 // pred_check
          %p239 = pneg %p67
        $region14: #{tpu_custom_call.1} parent=11 // pred_check_branch
          %241 = sbr.rel (%p239) target = $region16
        $region15: #{tpu_custom_call.1} parent=11 // pred_region
          %s243 = ssub.s32 1024, 1024
          %244 = vsyncadd [#allocation6], %s243
          %s245 = sshll.u32 [#allocation5], 4
          %s246 = int_to_ptr.vmem [resolvable:$true] %s245
          %251 = dma.hbm_to_vmem [thread:$0]  %s1, 1024, %s246, [#allocation6], 64, 64, 4
        $region16: #{tpu_custom_call.1} parent=11 // pred_fallthru
          _
        // Predicated region
        $region17: #{tpu_custom_call.1} parent=11 // pred_check
          %p252 = pneg %p88
        $region18: #{tpu_custom_call.1} parent=11 // pred_check_branch
          %254 = sbr.rel (%p252) target = $region20
        $region19: #{tpu_custom_call.1} parent=11 // pred_region
          %s256 = ssub.s32 16, 16
          %257 = vsyncadd [#allocation6], %s256
          %s259 = sshll.u32 [#allocation7], 4
          %s260 = int_to_ptr.vmem [resolvable:$true] %s259
          %262 = dma.hbm_to_vmem [thread:$0]  %s2, 16, %s260, [#allocation6]
        $region20: #{tpu_custom_call.1} parent=11 // pred_fallthru
          _
        // Predicated region
        $region21: #{tpu_custom_call.1} parent=11 // pred_check
          %p263 = pneg %p109
        $region22: #{tpu_custom_call.1} parent=11 // pred_check_branch
          %265 = sbr.rel (%p263) target = $region24
        $region23: #{tpu_custom_call.1} parent=11 // pred_region
          _
        $region24: #{tpu_custom_call.1} parent=11 // pred_fallthru
          _
        // Predicated region
        $region25: #{tpu_custom_call.1} parent=11 // pred_check
          %p266 = pneg %p130
        $region26: #{tpu_custom_call.1} parent=11 // pred_check_branch
          %268 = sbr.rel (%p266) target = $region28
        $region27: #{tpu_custom_call.1} parent=11 // pred_region
          _
        $region28: #{tpu_custom_call.1} parent=11 // pred_fallthru
          _
        // Predicated region
        $region29: #{tpu_custom_call.1} parent=11 // pred_check
          %p269 = pneg %p151
        $region30: #{tpu_custom_call.1} parent=11 // pred_check_branch
          %271 = sbr.rel (%p269) target = $region32
        $region31: #{tpu_custom_call.1} parent=11 // pred_region
          _
        $region32: #{tpu_custom_call.1} parent=11 // pred_fallthru
          _
        // Predicated region
        $region33: #{tpu_custom_call.1} parent=11 // pred_check
          %p272 = pneg %p198
        $region34: #{tpu_custom_call.1} parent=11 // pred_check_branch
          %274 = sbr.rel (%p272) target = $region36
        $region35: #{tpu_custom_call.1} parent=11 // pred_region
          %s276 = ssub.s32 256, 256
          %277 = vsyncadd [#allocation9], %s276
          %s278 = sshll.u32 [#allocation8], 4
          %s279 = int_to_ptr.vmem [resolvable:$true] %s278
          %284 = dma.hbm_to_vmem [thread:$0]  %s7, 256, %s279, [#allocation9], 128, 128, 8
        $region36: #{tpu_custom_call.1} parent=11 // pred_fallthru
          _
      $region12: #{tpu_custom_call.1} parent=5 // pred_fallthru
        _
      %p285 = scmp.lt.s32.totalorder %s20, 2
      // Predicated region
      $region37: #{tpu_custom_call.1} parent=5 // pred_check
        %p286 = pneg %p285
      $region38: #{tpu_custom_call.1} parent=5 // pred_check_branch
        %288 = sbr.rel (%p286) target = $region40
      $region39: #{tpu_custom_call.1} parent=5 // pred_region
        // Predicated region
        $region41: #{tpu_custom_call.1} parent=39 // pred_check
          %p289 = pneg %p40
        $region42: #{tpu_custom_call.1} parent=39 // pred_check_branch
          %291 = sbr.rel (%p289) target = $region44
        $region43: #{tpu_custom_call.1} parent=39 // pred_region
          %s292 = sand.u32 %s30, 1
          %s293 = scalar_lea.sflag [#allocation4], %s292
          %s294 = sand.u32 %s30, 1
          %s295 = smul.addr %s294, 24
          %s296 = scalar_lea.vmem [#allocation3], %s295
          %s297 = smul.u32 3, %s20
          %s299 = ssub.s32 384, 384
          %300 = vsyncadd %s293, %s299
          %s301 = smul.addr %s297, 128
          %s302 = scalar_lea.hbm %s0, %s301
          %s303 = sshll.u32 %s296, 4
          %s304 = int_to_ptr.vmem [resolvable:$true] %s303
          %309 = dma.hbm_to_vmem [thread:$0]  %s302, 384, %s304, %s293, 128, 128, 8
        $region44: #{tpu_custom_call.1} parent=39 // pred_fallthru
          _
        // Predicated region
        $region45: #{tpu_custom_call.1} parent=39 // pred_check
          %p310 = pneg %p171
        $region46: #{tpu_custom_call.1} parent=39 // pred_check_branch
          %312 = sbr.rel (%p310) target = $region48
        $region47: #{tpu_custom_call.1} parent=39 // pred_region
          %s313 = smul.u32 3, %s20
          %p314 = scmp.lt.s32.totalorder %s313, 5
          %s315 = scalar_select %p314, %s313, 5
          %s316 = smul.addr %s315, 8
          %s317 = scalar_lea.vmem %s6, %s316
          %s318 = smul.u32 3, %s20
        $region48: #{tpu_custom_call.1} parent=39 // pred_fallthru
          _
      $region40: #{tpu_custom_call.1} parent=5 // pred_fallthru
        _
      %p319 = scmp.le.s32.totalorder 1, %s20
      %p320 = scmp.lt.s32.totalorder %s20, 3
      %p321 = pnand %p319, %p320
      %p322 = pneg %p321
      // Predicated region
      $region49: #{tpu_custom_call.1} parent=5 // pred_check
        _
      $region50: #{tpu_custom_call.1} parent=5 // pred_check_branch
        %324 = sbr.rel (%p321) target = $region52
      $region51: #{tpu_custom_call.1} parent=5 // pred_region
        %s325 = ssub.s32 %s20, 1
        %s326 = sand.u32 %s33, 1
        %s327 = scalar_lea.sflag [#allocation4], %s326
        %s328 = sand.u32 %s33, 1
        %s329 = smul.addr %s328, 24
        %s330 = scalar_lea.vmem [#allocation3], %s329
        // Predicated region
        $region53: #{tpu_custom_call.1} parent=51 // pred_check
          %p331 = pneg %p46
        $region54: #{tpu_custom_call.1} parent=51 // pred_check_branch
          %333 = sbr.rel (%p331) target = $region56
        $region55: #{tpu_custom_call.1} parent=51 // pred_region
          %334 = dma.done %s327, 384
        $region56: #{tpu_custom_call.1} parent=51 // pred_fallthru
          _
        // Predicated region
        $region57: #{tpu_custom_call.1} parent=51 // pred_check
          %p335 = pneg %p67
        $region58: #{tpu_custom_call.1} parent=51 // pred_check_branch
          %337 = sbr.rel (%p335) target = $region60
        $region59: #{tpu_custom_call.1} parent=51 // pred_region
          %338 = dma.done [#allocation6], 1024
        $region60: #{tpu_custom_call.1} parent=51 // pred_fallthru
          _
        // Predicated region
        $region61: #{tpu_custom_call.1} parent=51 // pred_check
          %p339 = pneg %p88
        $region62: #{tpu_custom_call.1} parent=51 // pred_check_branch
          %341 = sbr.rel (%p339) target = $region64
        $region63: #{tpu_custom_call.1} parent=51 // pred_region
          %342 = dma.done [#allocation6], 16
        $region64: #{tpu_custom_call.1} parent=51 // pred_fallthru
          _
        // Predicated region
        $region65: #{tpu_custom_call.1} parent=51 // pred_check
          %p343 = pneg %p198
        $region66: #{tpu_custom_call.1} parent=51 // pred_check_branch
          %345 = sbr.rel (%p343) target = $region68
        $region67: #{tpu_custom_call.1} parent=51 // pred_region
          %346 = dma.done [#allocation9], 256
        $region68: #{tpu_custom_call.1} parent=51 // pred_fallthru
          _
        %s347 = sand.u32 %s33, 1
        %s348 = scalar_lea.sflag [#allocation4], %s347
        %s349 = sand.u32 %s33, 1
        %s350 = smul.addr %s349, 24
        %s351 = scalar_lea.vmem [#allocation3], %s350
        %p352 = pneg %p46
        %p353 = pneg %p43
        %p354 = pneg %p67
        %p355 = pneg %p64
        %p356 = pneg %p88
        %p357 = pneg %p85
        %p358 = pneg %p109
        %p359 = pneg %p106
        %p360 = pneg %p130
        %p361 = pneg %p127
        %p362 = pneg %p151
        %p363 = pneg %p148
        %s364 = smul.u32 3, %s25
        %p365 = scmp.lt.s32.totalorder %s364, 5
        %s366 = scalar_select %p365, %s364, 5
        %s367 = smul.addr %s366, 8
        %s368 = scalar_lea.vmem %s6, %s367
        %p369 = pneg %p177
        %p370 = pneg %p174
        %p371 = pneg %p198
        %p372 = pneg %p195
        %p373 = pneg %p224
        %p374 = pneg %p221
        %s375 = smul.u32 3, %s25
        %p376 = scmp.lt.s32.totalorder %s375, 5
        %s377 = scalar_select %p376, %s375, 5
        %s378 = smul.addr %s377, 8
        %s379 = scalar_lea.vmem %s8, %s378
        %s380 = smul.u32 3, %s25
        %s381 = smul.u32 3, %s25
        %p382 = scmp.lt.s32.totalorder %s381, 5
        %s383 = scalar_select %p382, %s381, 5
        %s384 = smul.addr %s383, 8
        %s385 = scalar_lea.vmem %s6, %s384
        %s386 = smul.u32 3, %s25
        %s387 = smul.u32 3, %s25
        %p388 = scmp.lt.s32.totalorder %s387, 5
        %s389 = scalar_select %p388, %s387, 5
        %s390 = smul.addr %s389, 8
        %s391 = scalar_lea.vmem %s8, %s390
        %s392 = smul.u32 3, %s25
        %v394 = vld [vmem:[%s330] sm:$0xff]
        %v395 = vld [vmem:[%s330 + $0x8] sm:$0xff]
        %v396 = vld [vmem:[%s330 + $0x10] sm:$0xff]
        %v397 = vpack.c.bf16 %v395, %v394
        %v398 = vpack.c.bf16 %v396, %v396
        %v399 = vld [vmem:[#allocation5] sm:$0xf]
        %v400 = vld [vmem:[#allocation5 + $0x4] sm:$0xf]
        %v401 = vld [vmem:[#allocation5 + $0x8] sm:$0xf]
        %v402 = vld [vmem:[#allocation5 + $0xc] sm:$0xf]
        %v403 = vld [vmem:[#allocation5 + $0x10] sm:$0xf]
        %v404 = vld [vmem:[#allocation5 + $0x14] sm:$0xf]
        %v405 = vld [vmem:[#allocation5 + $0x18] sm:$0xf]
        %v406 = vld [vmem:[#allocation5 + $0x1c] sm:$0xf]
        %v407 = vld [vmem:[#allocation5 + $0x20] sm:$0xf]
        %v408 = vld [vmem:[#allocation5 + $0x24] sm:$0xf]
        %v409 = vld [vmem:[#allocation5 + $0x28] sm:$0xf]
        %v410 = vld [vmem:[#allocation5 + $0x2c] sm:$0xf]
        %v411 = vld [vmem:[#allocation5 + $0x30] sm:$0xf]
        %v412 = vld [vmem:[#allocation5 + $0x34] sm:$0xf]
        %v413 = vld [vmem:[#allocation5 + $0x38] sm:$0xf]
        %v414 = vld [vmem:[#allocation5 + $0x3c] sm:$0xf]
        %v415 = vld [vmem:[#allocation7] sm:$0x1]
        %v417 = vlaneseq
        %v418 = vshrl.u32 %v417, 7
        %v419 = vsub.s32 0, %v418
        %v420 = vrot.slane %v415, %v419
        %v438 = vunpack.c.l.b16 %v399
        %v439 = vunpack.c.l.b16 %v400
        %v440 = vunpack.c.l.b16 %v401
        %v441 = vunpack.c.l.b16 %v402
        %v442 = vunpack.c.l.b16 %v403
        %v443 = vunpack.c.l.b16 %v404
        %v444 = vunpack.c.l.b16 %v405
        %v445 = vunpack.c.l.b16 %v406
        %v446 = vunpack.c.l.b16 %v407
        %v447 = vunpack.c.l.b16 %v408
        %v448 = vunpack.c.l.b16 %v409
        %v449 = vunpack.c.l.b16 %v410
        %v450 = vunpack.c.l.b16 %v411
        %v451 = vunpack.c.l.b16 %v412
        %v452 = vunpack.c.l.b16 %v413
        %v453 = vunpack.c.l.b16 %v414
        %v454 = vpack.c.b16 %v439, %v438
        %v455 = vpack.c.b16 %v441, %v440
        %v456 = vpack.c.b16 %v443, %v442
        %v457 = vpack.c.b16 %v445, %v444
        %v458 = vpack.c.b16 %v447, %v446
        %v459 = vpack.c.b16 %v449, %v448
        %v460 = vpack.c.b16 %v451, %v450
        %v461 = vpack.c.b16 %v453, %v452
        %470 = vmatprep.subr.bf16.mxu0 0
        %471 = vmatpush1.bf16.msra.mxu0 %v454
        %472 = vmatprep.subr.bf16.mxu0 0
        %473 = vmatpush1.bf16.msra.mxu0 %v455
        %474 = vmatprep.subr.bf16.mxu0 0
        %475 = vmatpush1.bf16.msra.mxu0 %v456
        %476 = vmatprep.subr.bf16.mxu0 0
        %477 = vmatpush1.bf16.msra.mxu0 %v457
        %478 = vmatprep.subr.bf16.mxu0 0
        %479 = vmatpush1.bf16.msra.mxu0 %v458
        %480 = vmatprep.subr.bf16.mxu0 0
        %481 = vmatpush1.bf16.msra.mxu0 %v459
        %482 = vmatprep.subr.bf16.mxu0 0
        %483 = vmatpush1.bf16.msra.mxu0 %v460
        %484 = vmatprep.subr.bf16.mxu0 0
        %485 = vmatpush1.bf16.msra.mxu0 %v461
        %486 = vmatprep.subr.bf16.mxu0 0
        %487 = vmatpush1.bf16.msra.mxu0 0
        %488 = vmatprep.subr.bf16.mxu0 0
        %489 = vmatpush1.bf16.msra.mxu0 0
        %490 = vmatprep.subr.bf16.mxu0 0
        %491 = vmatpush1.bf16.msra.mxu0 0
        %492 = vmatprep.subr.bf16.mxu0 0
        %493 = vmatpush1.bf16.msra.mxu0 0
        %494 = vmatprep.subr.bf16.mxu0 0
        %495 = vmatpush1.bf16.msra.mxu0 0
        %496 = vmatprep.subr.bf16.mxu0 0
        %497 = vmatpush1.bf16.msra.mxu0 0
        %498 = vmatprep.subr.bf16.mxu0 0
        %499 = vmatpush1.bf16.msra.mxu0 0
        %500 = vmatprep.subr.bf16.mxu0 0
        %501 = vmatpush1.bf16.msra.mxu0 0
        %502 = vmatprep.mubr.bf16.mxu0 0
        %503 = vmatmul.mubr.bf16.gmra.mrb[0].mxu0 %v397
        %v504 = vpop.f32.mrb[0].mxu0
        %v505 = vadd.f32 %v420, %v504
        %v506 = vpop.f32.mrb[0].mxu0
        %v507 = vpop.f32.mrb[0].mxu0
        %v508 = vadd.f32 %v420, %v507
        %v509 = vpop.f32.mrb[0].mxu0
        %510 = vmatprep.mubr.bf16.mxu0 0
        %511 = vmatmul.mubr.bf16.gmra.mrb[0].mxu0 %v398
        %v512 = vpop.f32.mrb[0].mxu0
        %v513 = vadd.f32 %v420, %v512
        %v514 = vpop.f32.mrb[0].mxu0
        %v515 = vpop.f32.mrb[0].mxu0
        %v516 = vpop.f32.mrb[0].mxu0
        %517 = vdwg.mxu0
        %v518 = vmul.f32 %v505, 0.2
        %v519 = vmul.f32 %v508, 0.2
        %v520 = vmul.f32 %v513, 0.2
        %v521 = vmax.f32 %v505, %v518
        %v522 = vmax.f32 %v508, %v519
        %v523 = vmax.f32 %v513, %v520
        %v524 = vpack.c.bf16 %v522, %v521
        %v525 = vpack.c.bf16 %v523, %v523
        %v526 = vld [vmem:[%s3] sm:$0xf]
        %v527 = vld [vmem:[%s3 + $0x4] sm:$0xf]
        %v528 = vld [vmem:[%s3 + $0x8] sm:$0xf]
        %v529 = vld [vmem:[%s3 + $0xc] sm:$0xf]
        %v530 = vld [vmem:[%s3 + $0x10] sm:$0xf]
        %v531 = vld [vmem:[%s3 + $0x14] sm:$0xf]
        %v532 = vld [vmem:[%s3 + $0x18] sm:$0xf]
        %v533 = vld [vmem:[%s3 + $0x1c] sm:$0xf]
        %v534 = vld [vmem:[%s3 + $0x20] sm:$0xf]
        %v535 = vld [vmem:[%s3 + $0x24] sm:$0xf]
        %v536 = vld [vmem:[%s3 + $0x28] sm:$0xf]
        %v537 = vld [vmem:[%s3 + $0x2c] sm:$0xf]
        %v538 = vld [vmem:[%s3 + $0x30] sm:$0xf]
        %v539 = vld [vmem:[%s3 + $0x34] sm:$0xf]
        %v540 = vld [vmem:[%s3 + $0x38] sm:$0xf]
        %v541 = vld [vmem:[%s3 + $0x3c] sm:$0xf]
        %v542 = vld [vmem:[%s4] sm:$0x1]
        %v544 = vlaneseq
        %v545 = vshrl.u32 %v544, 7
        %v546 = vsub.s32 0, %v545
        %v547 = vrot.slane %v542, %v546
        %v565 = vunpack.c.l.b16 %v526
        %v566 = vunpack.c.l.b16 %v527
        %v567 = vunpack.c.l.b16 %v528
        %v568 = vunpack.c.l.b16 %v529
        %v569 = vunpack.c.l.b16 %v530
        %v570 = vunpack.c.l.b16 %v531
        %v571 = vunpack.c.l.b16 %v532
        %v572 = vunpack.c.l.b16 %v533
        %v573 = vunpack.c.l.b16 %v534
        %v574 = vunpack.c.l.b16 %v535
        %v575 = vunpack.c.l.b16 %v536
        %v576 = vunpack.c.l.b16 %v537
        %v577 = vunpack.c.l.b16 %v538
        %v578 = vunpack.c.l.b16 %v539
        %v579 = vunpack.c.l.b16 %v540
        %v580 = vunpack.c.l.b16 %v541
        %v581 = vpack.c.b16 %v566, %v565
        %v582 = vpack.c.b16 %v568, %v567
        %v583 = vpack.c.b16 %v570, %v569
        %v584 = vpack.c.b16 %v572, %v571
        %v585 = vpack.c.b16 %v574, %v573
        %v586 = vpack.c.b16 %v576, %v575
        %v587 = vpack.c.b16 %v578, %v577
        %v588 = vpack.c.b16 %v580, %v579
        %597 = vmatprep.subr.bf16.mxu0 0
        %598 = vmatpush1.bf16.msra.mxu0 %v581
        %599 = vmatprep.subr.bf16.mxu0 0
        %600 = vmatpush1.bf16.msra.mxu0 %v582
        %601 = vmatprep.subr.bf16.mxu0 0
        %602 = vmatpush1.bf16.msra.mxu0 %v583
        %603 = vmatprep.subr.bf16.mxu0 0
        %604 = vmatpush1.bf16.msra.mxu0 %v584
        %605 = vmatprep.subr.bf16.mxu0 0
        %606 = vmatpush1.bf16.msra.mxu0 %v585
        %607 = vmatprep.subr.bf16.mxu0 0
        %608 = vmatpush1.bf16.msra.mxu0 %v586
        %609 = vmatprep.subr.bf16.mxu0 0
        %610 = vmatpush1.bf16.msra.mxu0 %v587
        %611 = vmatprep.subr.bf16.mxu0 0
        %612 = vmatpush1.bf16.msra.mxu0 %v588
        %613 = vmatprep.subr.bf16.mxu0 0
        %614 = vmatpush1.bf16.msra.mxu0 0
        %615 = vmatprep.subr.bf16.mxu0 0
        %616 = vmatpush1.bf16.msra.mxu0 0
        %617 = vmatprep.subr.bf16.mxu0 0
        %618 = vmatpush1.bf16.msra.mxu0 0
        %619 = vmatprep.subr.bf16.mxu0 0
        %620 = vmatpush1.bf16.msra.mxu0 0
        %621 = vmatprep.subr.bf16.mxu0 0
        %622 = vmatpush1.bf16.msra.mxu0 0
        %623 = vmatprep.subr.bf16.mxu0 0
        %624 = vmatpush1.bf16.msra.mxu0 0
        %625 = vmatprep.subr.bf16.mxu0 0
        %626 = vmatpush1.bf16.msra.mxu0 0
        %627 = vmatprep.subr.bf16.mxu0 0
        %628 = vmatpush1.bf16.msra.mxu0 0
        %629 = vmatprep.mubr.bf16.mxu0 0
        %630 = vmatmul.mubr.bf16.gmra.mrb[0].mxu0 %v524
        %v631 = vpop.f32.mrb[0].mxu0
        %v632 = vadd.f32 %v547, %v631
        %v633 = vpop.f32.mrb[0].mxu0
        %v634 = vpop.f32.mrb[0].mxu0
        %v635 = vadd.f32 %v547, %v634
        %v636 = vpop.f32.mrb[0].mxu0
        %637 = vmatprep.mubr.bf16.mxu0 0
        %638 = vmatmul.mubr.bf16.gmra.mrb[0].mxu0 %v525
        %v639 = vpop.f32.mrb[0].mxu0
        %v640 = vadd.f32 %v547, %v639
        %v641 = vpop.f32.mrb[0].mxu0
        %v642 = vpop.f32.mrb[0].mxu0
        %v643 = vpop.f32.mrb[0].mxu0
        %644 = vdwg.mxu0
        %v645 = vmul.f32 %v632, 0.2
        %v646 = vmul.f32 %v635, 0.2
        %v647 = vmul.f32 %v640, 0.2
        %v648 = vmax.f32 %v632, %v645
        %v649 = vmax.f32 %v635, %v646
        %v650 = vmax.f32 %v640, %v647
        %v651 = vadd.f32 %v648, %v394
        %v652 = vadd.f32 %v649, %v395
        %v653 = vadd.f32 %v650, %v396
        %v654 = vld [vmem:[%s385] sm:$0xff]
        %v655 = vld [vmem:[%s385 + $0x8] sm:$0xff]
        %v656 = vld [vmem:[%s385 + $0x10] sm:$0xff]
        %v657 = vlaneseq
        %v658 = vand.u32 %v657, 127
        %659 = vset.pattern.permute.xlu0 0
        %660 = vperm.xlu0 %659, %v654
        %v661 = vpop.permute.xlu0 %660
        %662 = vset.pattern.permute.xlu0 0
        %663 = vperm.xlu0 %662, %v655
        %v664 = vpop.permute.xlu0 %663
        %665 = vset.pattern.permute.xlu0 0
        %666 = vperm.xlu0 %665, %v656
        %v667 = vpop.permute.xlu0 %666
        %vm668 = vcmp.eq.s32.totalorder %v661, %v658
        %vm669 = vcmp.eq.s32.totalorder %v664, %v658
        %vm670 = vcmp.eq.s32.totalorder %v667, %v658
        %v671 = vsel %vm668, 1, 0
        %v672 = vsel %vm669, 1, 0
        %v673 = vsel %vm670, 1, 0
        %v674 = vcvt.s32.f32 %v671
        %v675 = vcvt.s32.f32 %v672
        %v676 = vcvt.s32.f32 %v673
        %v677 = vld [vmem:[#allocation8] sm:$0xff]
        %v678 = vld [vmem:[#allocation8 + $0x8] sm:$0xff]
        %vm679 = vcmask 130048
        %v681 = vsel %vm679, %v674, 0
        %v684 = vsel %vm679, %v675, 0
        %v687 = vsel %vm679, %v676, 0
        %689 = vmatprep.subr.mxu0 0.0
        %690 = vmatpush1.msra.mxu0 %v677
        %691 = vmatprep.subr.mxu0 0.0
        %692 = vmatpush1.msra.mxu0 %v678
        %693 = vmatprep.subr.mxu0 0.0
        %694 = vmatpush1.msra.mxu0 0.0
        %695 = vmatprep.subr.mxu0 0.0
        %696 = vmatpush1.msra.mxu0 0.0
        %697 = vmatprep.subr.mxu0 0.0
        %698 = vmatpush1.msra.mxu0 0.0
        %699 = vmatprep.subr.mxu0 0.0
        %700 = vmatpush1.msra.mxu0 0.0
        %701 = vmatprep.subr.mxu0 0.0
        %702 = vmatpush1.msra.mxu0 0.0
        %703 = vmatprep.subr.mxu0 0.0
        %704 = vmatpush1.msra.mxu0 0.0
        %705 = vmatprep.subr.mxu0 0.0
        %706 = vmatpush1.msra.mxu0 0.0
        %707 = vmatprep.subr.mxu0 0.0
        %708 = vmatpush1.msra.mxu0 0.0
        %709 = vmatprep.subr.mxu0 0.0
        %710 = vmatpush1.msra.mxu0 0.0
        %711 = vmatprep.subr.mxu0 0.0
        %712 = vmatpush1.msra.mxu0 0.0
        %713 = vmatprep.subr.mxu0 0.0
        %714 = vmatpush1.msra.mxu0 0.0
        %715 = vmatprep.subr.mxu0 0.0
        %716 = vmatpush1.msra.mxu0 0.0
        %717 = vmatprep.subr.mxu0 0.0
        %718 = vmatpush1.msra.mxu0 0.0
        %719 = vmatprep.subr.mxu0 0.0
        %720 = vmatpush1.msra.mxu0 0.0
        %721 = vmatprep.subr.mxu0 0.0
        %722 = vmatpush1.msra.mxu0 0.0
        %723 = vmatprep.subr.mxu0 0.0
        %724 = vmatpush1.msra.mxu0 0.0
        %725 = vmatprep.subr.mxu0 0.0
        %726 = vmatpush1.msra.mxu0 0.0
        %727 = vmatprep.subr.mxu0 0.0
        %728 = vmatpush1.msra.mxu0 0.0
        %729 = vmatprep.subr.mxu0 0.0
        %730 = vmatpush1.msra.mxu0 0.0
        %731 = vmatprep.subr.mxu0 0.0
        %732 = vmatpush1.msra.mxu0 0.0
        %733 = vmatprep.subr.mxu0 0.0
        %734 = vmatpush1.msra.mxu0 0.0
        %735 = vmatprep.subr.mxu0 0.0
        %736 = vmatpush1.msra.mxu0 0.0
        %737 = vmatprep.subr.mxu0 0.0
        %738 = vmatpush1.msra.mxu0 0.0
        %739 = vmatprep.subr.mxu0 0.0
        %740 = vmatpush1.msra.mxu0 0.0
        %741 = vmatprep.subr.mxu0 0.0
        %742 = vmatpush1.msra.mxu0 0.0
        %743 = vmatprep.subr.mxu0 0.0
        %744 = vmatpush1.msra.mxu0 0.0
        %745 = vmatprep.subr.mxu0 0.0
        %746 = vmatpush1.msra.mxu0 0.0
        %747 = vmatprep.subr.mxu0 0.0
        %748 = vmatpush1.msra.mxu0 0.0
        %749 = vmatprep.subr.mxu0 0.0
        %750 = vmatpush1.msra.mxu0 0.0
        %751 = vmatprep.subr.mxu0 0.0
        %752 = vmatpush1.msra.mxu0 0.0
        %753 = vmatprep.mubr.f32.mxu0 0.0
        %754 = vmatmul.mubr.f32.gmra.mrb[0].mxu0 %v681
        %v755 = vpop.f32.mrb[0].mxu0
        %v756 = vadd.f32 0.0, %v755
        %v757 = vpop.f32.mrb[0].mxu0
        %758 = vmatprep.mubr.f32.mxu0 0.0
        %759 = vmatmul.mubr.f32.gmra.mrb[0].mxu0 %v684
        %v760 = vpop.f32.mrb[0].mxu0
        %v761 = vadd.f32 0.0, %v760
        %v762 = vpop.f32.mrb[0].mxu0
        %763 = vmatprep.mubr.f32.mxu0 0.0
        %764 = vmatmul.mubr.f32.gmra.mrb[0].mxu0 %v687
        %v765 = vpop.f32.mrb[0].mxu0
        %v766 = vadd.f32 0.0, %v765
        %v767 = vpop.f32.mrb[0].mxu0
        %768 = vdwg.mxu0
        %v769 = vmul.f32 %v651, %v756
        %v770 = vmul.f32 %v652, %v761
        %v771 = vmul.f32 %v653, %v766
        %772 = vadd.xlane.f32.xlu0 %v769
        %v773 = vpop.xlane.xlu0 %772
        %774 = vadd.xlane.f32.xlu0 %v770
        %v775 = vpop.xlane.xlu0 %774
        %776 = vadd.xlane.f32.xlu0 %v771
        %v777 = vpop.xlane.xlu0 %776
        %s778 = sld [smem:[#allocation2]]
        %v779 = vstv %s778
        %v780 = vadd.f32 %v773, %v779
        %v781 = vadd.f32 %v775, %v779
        %v782 = vadd.f32 %v777, %v779
        %vm783 = vcmask 7168
        %784 = vst.msk [vmem:[%s391] sm:$0xff] %vm783, %v780
        %785 = vst.msk [vmem:[%s391 + $0x8] sm:$0xff] %vm783, %v781
        %786 = vst.msk [vmem:[%s391 + $0x10] sm:$0xff] %vm783, %v782
        %s787 = smul.u32 3, %s25
        %p788 = scmp.lt.s32.totalorder %s787, 5
        %s789 = scalar_select %p788, %s787, 5
        %s790 = smul.addr %s789, 8
        %s791 = scalar_lea.vmem %s8, %s790
        // Predicated region
        $region69: #{tpu_custom_call.1} parent=51 // pred_check
          %p792 = pneg %p221
        $region70: #{tpu_custom_call.1} parent=51 // pred_check_branch
          %794 = sbr.rel (%p792) target = $region72
        $region71: #{tpu_custom_call.1} parent=51 // pred_region
          %s795 = smul.u32 3, %s25
        $region72: #{tpu_custom_call.1} parent=51 // pred_fallthru
          _
      $region52: #{tpu_custom_call.1} parent=5 // pred_fallthru
        _
      %p796 = scmp.le.s32.totalorder 2, %s20
      // Predicated region
      $region73: #{tpu_custom_call.1} parent=5 // pred_check
        %p797 = pneg %p796
      $region74: #{tpu_custom_call.1} parent=5 // pred_check_branch
        %799 = sbr.rel (%p797) target = $region76
      $region75: #{tpu_custom_call.1} parent=5 // pred_region
        %s800 = ssub.s32 %s20, 2
        // Predicated region
        $region77: #{tpu_custom_call.1} parent=75 // pred_check
          %p801 = pneg %p227
        $region78: #{tpu_custom_call.1} parent=75 // pred_check_branch
          %803 = sbr.rel (%p801) target = $region80
        $region79: #{tpu_custom_call.1} parent=75 // pred_region
          %s804 = smul.u32 3, %s26
          %p805 = scmp.lt.s32.totalorder %s804, 5
          %s806 = scalar_select %p805, %s804, 5
          %s807 = smul.addr %s806, 8
          %s808 = scalar_lea.vmem %s8, %s807
        $region80: #{tpu_custom_call.1} parent=75 // pred_fallthru
          _
      $region76: #{tpu_custom_call.1} parent=5 // pred_fallthru
        _
    $region6: #{tpu_custom_call.1} parent=1 // loop_footer
      %s24 = sadd.s32 1, %s20
    $region7: #{tpu_custom_call.1} parent=1 // loop_footer_branch
      %19 = sbr.rel target = $region3
    $region8: #{tpu_custom_call.1} parent=1 // loop_exit
      _
    %809 = vsyncpa [#allocation4], 1
    %s810 = scalar_lea.sflag [#allocation4], 1
    %811 = vsyncpa %s810, 1
    %812 = vsyncpa [#allocation6], 1
    %813 = vsyncpa [#allocation9], 1

</llo_original>
